<compile_context>
chip_gen: v7x
topology: tpu7x:2x2x1
jax: 0.10.0
libtpu: 0.0.40
codegen_flags: <defaults>
</compile_context>

<pallas_src>
import functools

import jax
import jax.numpy as jnp
from jax.experimental import pallas as pl
from jax.experimental.pallas import tpu as pltpu

_LANE = 128


def _round_up(v, m):
    return (v + m - 1) // m * m


def _pick_row_tile(n):
    """Largest row tile (multiple of 8, <=256) that divides n, else full n."""
    for t in (256, 128, 64, 32, 16, 8):
        if n >= t and n % t == 0:
            return t
    return n


def _sage_conv_kernel(a_ref, xfull_ref, xtile_ref, w_ref, b_ref, out_ref, *,
                      apply_relu, apply_log_softmax, valid_out):
    # Mean aggregation for this row tile: [tm, N] @ [N, Fin] -> f32 [tm, Fin].
    agg = jnp.dot(a_ref[...], xfull_ref[...],
                  preferred_element_type=jnp.float32)

    # Fused lin_l / lin_r: one matmul against stacked weights [w_l ; w_r].
    feat = jnp.concatenate(
        [agg.astype(jnp.bfloat16), xtile_ref[...]], axis=1)          # [tm, 2*Fin]
    z = jnp.dot(feat, w_ref[...],
                preferred_element_type=jnp.float32) + b_ref[...]     # [tm, Fout_pad]

    if apply_relu:
        z = jnp.maximum(z, 0.0)
    # Dropout: identity in eval mode.

    if apply_log_softmax:
        if valid_out < z.shape[1]:
            # Mask padded class lanes so they don't corrupt the normalizer.
            lane = jax.lax.broadcasted_iota(jnp.int32, z.shape, dimension=1)
            z = jnp.where(lane < valid_out, z, -jnp.inf)
        m = jnp.max(z, axis=1, keepdims=True)
        zs = z - m
        lse = jnp.log(jnp.sum(jnp.exp(zs), axis=1, keepdims=True))
        z = zs - lse

    out_ref[...] = z.astype(out_ref.dtype)


def _sage_conv(a_bf16, x_bf16, w_fused, bias, *, apply_relu, apply_log_softmax,
               out_valid, out_dtype, vmem_limit):
    n, fin = x_bf16.shape
    k2, fout_pad = w_fused.shape          # k2 == 2 * fin, fout_pad % 128 == 0
    tm = _pick_row_tile(n)
    grid = (n // tm,)

    kernel = functools.partial(
        _sage_conv_kernel,
        apply_relu=apply_relu,
        apply_log_softmax=apply_log_softmax,
        valid_out=out_valid,
    )

    return pl.pallas_call(
        kernel,
        out_shape=jax.ShapeDtypeStruct((n, fout_pad), out_dtype),
        grid=grid,
        in_specs=[
            pl.BlockSpec((tm, n), lambda i: (i, 0)),         # A row tile
            pl.BlockSpec((n, fin), lambda i: (0, 0)),        # X resident (agg)
            pl.BlockSpec((tm, fin), lambda i: (i, 0)),       # X row tile (root)
            pl.BlockSpec((k2, fout_pad), lambda i: (0, 0)),  # fused W resident
            pl.BlockSpec((1, fout_pad), lambda i: (0, 0)),   # bias resident
        ],
        out_specs=pl.BlockSpec((tm, fout_pad), lambda i: (i, 0)),
        compiler_params=pltpu.CompilerParams(
            dimension_semantics=("parallel",),
            vmem_limit_bytes=vmem_limit,
        ),
    )(a_bf16, x_bf16, x_bf16, w_fused, bias)


def _fuse_params(w_l, w_r, b):
    """Stack [w_l ; w_r] along K and pad the output dim to a 128-lane multiple."""
    fin, fout = w_l.shape
    fout_pad = _round_up(fout, _LANE)
    w = jnp.concatenate([w_l, w_r], axis=0)                   # [2*fin, fout]
    w = jnp.pad(w, ((0, 0), (0, fout_pad - fout)))
    b = jnp.pad(jnp.reshape(b, (1, -1)), ((0, 0), (0, fout_pad - fout)))
    return w.astype(jnp.bfloat16), b.astype(jnp.float32)


def graphsage_forward(x, edge_index, params):
    """x: [N, F] float32, edge_index: [2, E] int32 (row 0 = src, row 1 = dst)."""
    n = x.shape[0]
    src, dst = edge_index[0], edge_index[1]

    # Dense row-normalized mean-aggregation adjacency (wrapper glue):
    # A[i, j] = (# edges j -> i) / max(1, # edges into i)
    counts = jnp.zeros((n, n), jnp.float32).at[dst, src].add(1.0)
    deg = counts.sum(axis=1, keepdims=True)
    a_norm = (counts / jnp.maximum(deg, 1.0)).astype(jnp.bfloat16)

    w1l, w1r, b1, w2l, w2r, b2 = params
    hidden_dim = w1l.shape[1]
    num_classes = w2l.shape[1]

    w1, bias1 = _fuse_params(w1l, w1r, b1)
    w2, bias2 = _fuse_params(w2l, w2r, b2)

    try:
        vmem_cap = pltpu.get_tpu_info().vmem_capacity_bytes
    except Exception:
        vmem_cap = 64 << 20
    vmem_limit = min(int(vmem_cap * 3 // 4), 100 << 20)

    # Layer 1: SAGEConv + ReLU (dropout identity in eval mode).
    h_pad = _sage_conv(a_norm, x.astype(jnp.bfloat16), w1, bias1,
                       apply_relu=True, apply_log_softmax=False,
                       out_valid=hidden_dim, out_dtype=jnp.bfloat16,
                       vmem_limit=vmem_limit)
    h = h_pad[:, :hidden_dim]

    # Layer 2: SAGEConv + log_softmax over classes.
    z_pad = _sage_conv(a_norm, h, w2, bias2,
                       apply_relu=False, apply_log_softmax=True,
                       out_valid=num_classes, out_dtype=jnp.float32,
                       vmem_limit=vmem_limit)
    return z_pad[:, :num_classes]


def graphsage_reference(x, edge_index, params):
    """Pure-JAX f32 reference of the same forward pass."""
    n = x.shape[0]
    src, dst = edge_index[0], edge_index[1]
    counts = jnp.zeros((n, n), jnp.float32).at[dst, src].add(1.0)
    a = counts / jnp.maximum(counts.sum(axis=1, keepdims=True), 1.0)
    w1l, w1r, b1, w2l, w2r, b2 = params
    h = jnp.maximum((a @ x) @ w1l + x @ w1r + b1, 0.0)
    z = (a @ h) @ w2l + h @ w2r + b2
    return jax.nn.log_softmax(z, axis=1)


def init_params(key, num_features, hidden_dim, num_classes):
    """Deterministic glorot-uniform-ish init; weights stored as [in, out]."""
    ks = jax.random.split(key, 6)

    def glorot(k, fan_in, fan_out):
        lim = (6.0 / (fan_in + fan_out)) ** 0.5
        return jax.random.uniform(k, (fan_in, fan_out), jnp.float32, -lim, lim)

    w1l = glorot(ks[0], num_features, hidden_dim)   # lin_l layer 1 (with bias)
    w1r = glorot(ks[1], num_features, hidden_dim)   # lin_r layer 1 (no bias)
    b1 = jax.random.uniform(ks[2], (1, hidden_dim), jnp.float32, -0.1, 0.1)
    w2l = glorot(ks[3], hidden_dim, num_classes)
    w2r = glorot(ks[4], hidden_dim, num_classes)
    b2 = jax.random.uniform(ks[5], (1, num_classes), jnp.float32, -0.1, 0.1)
    return (w1l, w1r, b1, w2l, w2r, b2)


if __name__ == "__main__":
    key = jax.random.PRNGKey(0)
    k_x, k_e, k_p = jax.random.split(key, 3)

    num_nodes = 16
    num_features = 8
    hidden_dim = 32
    num_classes = 4
    num_edges = 48

    x = jax.random.normal(k_x, (num_nodes, num_features), jnp.float32)
    edge_index = jax.random.randint(k_e, (2, num_edges), 0, num_nodes, jnp.int32)
    params = init_params(k_p, num_features, hidden_dim, num_classes)

    out = graphsage_forward(x, edge_index, params)
    out = jax.block_until_ready(out)

    assert out.shape == (num_nodes, num_classes)
    assert bool(jnp.all(jnp.isfinite(out)))
    # log_softmax rows should exponentiate to ~1.
    row_sums = jnp.sum(jnp.exp(out), axis=1)
    assert bool(jnp.all(jnp.abs(row_sums - 1.0) < 1e-3))
    # Match the f32 reference within bf16 tolerance.
    ref = graphsage_reference(x, edge_index, params)
    assert bool(jnp.max(jnp.abs(out - ref)) < 0.2)

    print("KERNEL_OK")
</pallas_src>

<mosaic_0001>
module attributes {stable_mosaic.version = 11 : i64} {
  func.func @_sage_conv_kernel(%arg0: i32, %arg1: memref<16x16xbf16, #tpu.memory_space<vmem>>, %arg2: memref<16x8xbf16, #tpu.memory_space<vmem>>, %arg3: memref<16x8xbf16, #tpu.memory_space<vmem>>, %arg4: memref<16x128xbf16, #tpu.memory_space<vmem>>, %arg5: memref<1x128xf32, #tpu.memory_space<vmem>>, %arg6: memref<16x128xbf16, #tpu.memory_space<vmem>>) attributes {dimension_semantics = [#tpu.dimension_semantics<parallel>], iteration_bounds = array<i64: 1>, scalar_prefetch = 0 : i64, scratch_operands = 0 : i64, tpu.core_type = #tpu.core_type<tc>, window_params = [{transform_indices = @transform_0, window_bounds = array<i64: 16, 16>}, {pipeline_mode = #tpu.pipeline_mode<synchronous>, transform_indices = @transform_1, window_bounds = array<i64: 16, 8>}, {transform_indices = @transform_2, window_bounds = array<i64: 16, 8>}, {pipeline_mode = #tpu.pipeline_mode<synchronous>, transform_indices = @transform_3, window_bounds = array<i64: 16, 128>}, {pipeline_mode = #tpu.pipeline_mode<synchronous>, transform_indices = @transform_4, window_bounds = array<i64: 1, 128>}, {transform_indices = @transform_5, window_bounds = array<i64: 16, 128>}]} {
    %c0 = arith.constant 0 : index
    %c0_0 = arith.constant 0 : index
    %0 = vector.load %arg1[%c0, %c0_0] : memref<16x16xbf16, #tpu.memory_space<vmem>>, vector<16x16xbf16>
    %c0_1 = arith.constant 0 : index
    %c0_2 = arith.constant 0 : index
    %1 = vector.load %arg2[%c0_1, %c0_2] : memref<16x8xbf16, #tpu.memory_space<vmem>>, vector<16x8xbf16>
    %cst = arith.constant dense<0.000000e+00> : vector<16x8xf32>
    %2 = tpu.matmul %0, %1, %cst {dimension_numbers = #tpu.dot_dimension_numbers<[1], [0], [0], [1], [0, 0, 1, 1], [], []>} : vector<16x16xbf16>, vector<16x8xbf16>, vector<16x8xf32> -> vector<16x8xf32>
    %3 = arith.truncf %2 : vector<16x8xf32> to vector<16x8xbf16>
    %c0_3 = arith.constant 0 : index
    %c0_4 = arith.constant 0 : index
    %4 = vector.load %arg3[%c0_3, %c0_4] : memref<16x8xbf16, #tpu.memory_space<vmem>>, vector<16x8xbf16>
    %5 = tpu.concatenate %3, %4 in 1 : vector<16x8xbf16>, vector<16x8xbf16> -> vector<16x16xbf16>
    %c0_5 = arith.constant 0 : index
    %c0_6 = arith.constant 0 : index
    %6 = vector.load %arg4[%c0_5, %c0_6] : memref<16x128xbf16, #tpu.memory_space<vmem>>, vector<16x128xbf16>
    %cst_7 = arith.constant dense<0.000000e+00> : vector<16x128xf32>
    %7 = tpu.matmul %5, %6, %cst_7 {dimension_numbers = #tpu.dot_dimension_numbers<[1], [0], [0], [1], [0, 0, 1, 1], [], []>} : vector<16x16xbf16>, vector<16x128xbf16>, vector<16x128xf32> -> vector<16x128xf32>
    %c0_8 = arith.constant 0 : index
    %c0_9 = arith.constant 0 : index
    %8 = vector.load %arg5[%c0_8, %c0_9] : memref<1x128xf32, #tpu.memory_space<vmem>>, vector<1x128xf32>
    %9 = vector.broadcast %8 : vector<1x128xf32> to vector<16x128xf32>
    %10 = arith.addf %7, %9 : vector<16x128xf32>
    %cst_10 = arith.constant 0.000000e+00 : f32
    %11 = vector.broadcast %cst_10 : f32 to vector<16x128xf32>
    %12 = arith.maximumf %10, %11 : vector<16x128xf32>
    %13 = arith.truncf %12 : vector<16x128xf32> to vector<16x128xbf16>
    %c0_11 = arith.constant 0 : index
    %c0_12 = arith.constant 0 : index
    %14 = vector.load %arg6[%c0_11, %c0_12] : memref<16x128xbf16, #tpu.memory_space<vmem>>, vector<16x128xbf16>
    tpu.vector_store %arg6[%c0_11, %c0_12], %13 {strides = array<i32>} : memref<16x128xbf16, #tpu.memory_space<vmem>>, vector<16x128xbf16>,
    return
  }
  func.func @transform_0(%arg0: i32) -> (i32, i32) {
    %c0_i32 = arith.constant 0 : i32
    %c0_i32_0 = arith.constant 0 : i32
    return %arg0, %c0_i32 : i32, i32
  }
  func.func @transform_1(%arg0: i32) -> (i32, i32) {
    %c0_i32 = arith.constant 0 : i32
    %c0_i32_0 = arith.constant 0 : i32
    %c0_i32_1 = arith.constant 0 : i32
    return %c0_i32, %c0_i32_0 : i32, i32
  }
  func.func @transform_2(%arg0: i32) -> (i32, i32) {
    %c0_i32 = arith.constant 0 : i32
    %c0_i32_0 = arith.constant 0 : i32
    return %arg0, %c0_i32 : i32, i32
  }
  func.func @transform_3(%arg0: i32) -> (i32, i32) {
    %c0_i32 = arith.constant 0 : i32
    %c0_i32_0 = arith.constant 0 : i32
    %c0_i32_1 = arith.constant 0 : i32
    return %c0_i32, %c0_i32_0 : i32, i32
  }
  func.func @transform_4(%arg0: i32) -> (i32, i32) {
    %c0_i32 = arith.constant 0 : i32
    %c0_i32_0 = arith.constant 0 : i32
    %c0_i32_1 = arith.constant 0 : i32
    return %c0_i32, %c0_i32_0 : i32, i32
  }
  func.func @transform_5(%arg0: i32) -> (i32, i32) {
    %c0_i32 = arith.constant 0 : i32
    %c0_i32_0 = arith.constant 0 : i32
    return %arg0, %c0_i32 : i32, i32
  }
}

</mosaic_0001>

<llo_original>
// kernel: tpu_custom_call.1
$region0: #{tpu_custom_call.1}
  #allocation0 [shape = 'u32[]', space=smem, size = 0x4, offset = 0x4, fixed_abs, tag = 'smem constant byte address 0x4 - core index']
  #allocation1 [shape = 'u32[144,128]{1,0:T(1,128)}', space=vmem, size = 0x12000, scoped, tag = 'internal scratch']
  %s0 = inlined_call_operand.vmem [shape: bf16[16,16], index: 0, kind: input, shape index: {}]
  %s1 = inlined_call_operand.vmem [shape: bf16[16,8], index: 1, kind: input, shape index: {}]
  %s2 = inlined_call_operand.vmem [shape: bf16[16,8], index: 2, kind: input, shape index: {}]
  %s3 = inlined_call_operand.vmem [shape: bf16[16,128], index: 3, kind: input, shape index: {}]
  %s4 = inlined_call_operand.vmem [shape: f32[1,128], index: 4, kind: input, shape index: {}]
  %s5 = inlined_call_operand.hbm [shape: bf16[16,128], index: 5, kind: output, shape index: {}]
  %s6 = sld [smem:[#allocation0]]
  $region30: #{tpu_custom_call.1} parent=0
    _
  %s8 = ssub.s32 1, %s6
  %s9 = scalar_select 0, %s8, %s6
  $region1: #{tpu_custom_call.1} parent=0
    #allocation2 [shape = 'u8[4096]{0}', space=vmem, size = 0x1000, scoped, tag = 'output window, operand 0, single buffered']
    #allocation3 [shape = 's32[1]{0}', space=sflag, size = 0x4, scoped, tag = 'scoped memory for tpu_custom_call.1']
    %10 = vsyncpa [#allocation3], 0
    // Predicated region
    $region2: #{tpu_custom_call.1} parent=1 // pred_check
      _
    $region3: #{tpu_custom_call.1} parent=1 // pred_check_branch
      %12 = sbr.rel (0) target = $region5
    $region4: #{tpu_custom_call.1} parent=1 // pred_region
      _
    $region5: #{tpu_custom_call.1} parent=1 // pred_fallthru
      _
    // Predicated region
    $region6: #{tpu_custom_call.1} parent=1 // pred_check
      _
    $region7: #{tpu_custom_call.1} parent=1 // pred_check_branch
      %14 = sbr.rel (0) target = $region9
    $region8: #{tpu_custom_call.1} parent=1 // pred_region
      _
    $region9: #{tpu_custom_call.1} parent=1 // pred_fallthru
      _
    // Predicated region
    $region10: #{tpu_custom_call.1} parent=1 // pred_check
      _
    $region11: #{tpu_custom_call.1} parent=1 // pred_check_branch
      %16 = sbr.rel (0) target = $region13
    $region12: #{tpu_custom_call.1} parent=1 // pred_region
      _
    $region13: #{tpu_custom_call.1} parent=1 // pred_fallthru
      _
    // Predicated region
    $region14: #{tpu_custom_call.1} parent=1 // pred_check
      _
    $region15: #{tpu_custom_call.1} parent=1 // pred_check_branch
      %18 = sbr.rel (0) target = $region17
    $region16: #{tpu_custom_call.1} parent=1 // pred_region
      _
    $region17: #{tpu_custom_call.1} parent=1 // pred_fallthru
      _
    // Predicated region
    $region18: #{tpu_custom_call.1} parent=1 // pred_check
      _
    $region19: #{tpu_custom_call.1} parent=1 // pred_check_branch
      %20 = sbr.rel (0) target = $region21
    $region20: #{tpu_custom_call.1} parent=1 // pred_region
      _
    $region21: #{tpu_custom_call.1} parent=1 // pred_fallthru
      _
    %v22 = vld [vmem:[%s0] sm:$0xf]
    %v23 = vld [vmem:[%s0 + $0x4] sm:$0xf]
    %v24 = vld [vmem:[%s1] sm:$0xf]
    %v25 = vld [vmem:[%s1 + $0x4] sm:$0xf]
    %v28 = vunpack.c.l.b16 %v22
    %v29 = vunpack.c.l.b16 %v23
    %v30 = vpack.c.b16 %v29, %v28
    %v33 = vunpack.c.l.b16 %v24
    %v34 = vunpack.c.l.b16 %v25
    %v35 = vpack.c.b16 %v34, %v33
    %vm37 = vcmask 130048
    %v39 = vsel %vm37, %v30, 0
    %41 = vmatprep.subr.bf16.mxu0 0
    %42 = vmatpush1.bf16.msra.mxu0 %v35
    %43 = vmatprep.subr.bf16.mxu0 0
    %44 = vmatpush1.bf16.msra.mxu0 0
    %45 = vmatprep.subr.bf16.mxu0 0
    %46 = vmatpush1.bf16.msra.mxu0 0
    %47 = vmatprep.subr.bf16.mxu0 0
    %48 = vmatpush1.bf16.msra.mxu0 0
    %49 = vmatprep.subr.bf16.mxu0 0
    %50 = vmatpush1.bf16.msra.mxu0 0
    %51 = vmatprep.subr.bf16.mxu0 0
    %52 = vmatpush1.bf16.msra.mxu0 0
    %53 = vmatprep.subr.bf16.mxu0 0
    %54 = vmatpush1.bf16.msra.mxu0 0
    %55 = vmatprep.subr.bf16.mxu0 0
    %56 = vmatpush1.bf16.msra.mxu0 0
    %57 = vmatprep.subr.bf16.mxu0 0
    %58 = vmatpush1.bf16.msra.mxu0 0
    %59 = vmatprep.subr.bf16.mxu0 0
    %60 = vmatpush1.bf16.msra.mxu0 0
    %61 = vmatprep.subr.bf16.mxu0 0
    %62 = vmatpush1.bf16.msra.mxu0 0
    %63 = vmatprep.subr.bf16.mxu0 0
    %64 = vmatpush1.bf16.msra.mxu0 0
    %65 = vmatprep.subr.bf16.mxu0 0
    %66 = vmatpush1.bf16.msra.mxu0 0
    %67 = vmatprep.subr.bf16.mxu0 0
    %68 = vmatpush1.bf16.msra.mxu0 0
    %69 = vmatprep.subr.bf16.mxu0 0
    %70 = vmatpush1.bf16.msra.mxu0 0
    %71 = vmatprep.subr.bf16.mxu0 0
    %72 = vmatpush1.bf16.msra.mxu0 0
    %73 = vmatprep.mubr.bf16.mxu0 0
    %74 = vmatmul.mubr.bf16.gmra.mrb[0].mxu0 %v39
    %v75 = vpop.f32.mrb[0].mxu0
    %v76 = vadd.f32 0.0, %v75
    %v77 = vpop.f32.mrb[0].mxu0
    %v78 = vpop.f32.mrb[0].mxu0
    %v79 = vadd.f32 0.0, %v78
    %v80 = vpop.f32.mrb[0].mxu0
    %81 = vdwg.mxu0
    %v82 = vpack.c.bf16 %v79, %v76
    %v83 = vld [vmem:[%s2] sm:$0xf]
    %v84 = vld [vmem:[%s2 + $0x4] sm:$0xf]
    %v87 = vunpack.c.l.b16 %v83
    %v88 = vunpack.c.l.b16 %v84
    %v89 = vpack.c.b16 %v88, %v87
    %90 = vrot.lane.b32.xlu0 %v89, 8
    %v91 = vpop.permute.xlu0 %90
    %vm92 = vcmask 64512
    %v95 = vsel %vm92, %v82, %v91
    %v96 = vld [vmem:[%s3] sm:$0xf]
    %v97 = vld [vmem:[%s3 + $0x4] sm:$0xf]
    %v98 = vld [vmem:[%s4] sm:$0x1]
    %v100 = vlaneseq
    %v101 = vshrl.u32 %v100, 7
    %v102 = vsub.s32 0, %v101
    %v103 = vrot.slane %v98, %v102
    %v107 = vunpack.c.l.b16 %v96
    %v108 = vunpack.c.l.b16 %v97
    %v109 = vpack.c.b16 %v108, %v107
    %v111 = vsel %vm37, %v95, 0
    %113 = vmatprep.subr.bf16.mxu0 0
    %114 = vmatpush1.bf16.msra.mxu0 %v109
    %115 = vmatprep.subr.bf16.mxu0 0
    %116 = vmatpush1.bf16.msra.mxu0 0
    %117 = vmatprep.subr.bf16.mxu0 0
    %118 = vmatpush1.bf16.msra.mxu0 0
    %119 = vmatprep.subr.bf16.mxu0 0
    %120 = vmatpush1.bf16.msra.mxu0 0
    %121 = vmatprep.subr.bf16.mxu0 0
    %122 = vmatpush1.bf16.msra.mxu0 0
    %123 = vmatprep.subr.bf16.mxu0 0
    %124 = vmatpush1.bf16.msra.mxu0 0
    %125 = vmatprep.subr.bf16.mxu0 0
    %126 = vmatpush1.bf16.msra.mxu0 0
    %127 = vmatprep.subr.bf16.mxu0 0
    %128 = vmatpush1.bf16.msra.mxu0 0
    %129 = vmatprep.subr.bf16.mxu0 0
    %130 = vmatpush1.bf16.msra.mxu0 0
    %131 = vmatprep.subr.bf16.mxu0 0
    %132 = vmatpush1.bf16.msra.mxu0 0
    %133 = vmatprep.subr.bf16.mxu0 0
    %134 = vmatpush1.bf16.msra.mxu0 0
    %135 = vmatprep.subr.bf16.mxu0 0
    %136 = vmatpush1.bf16.msra.mxu0 0
    %137 = vmatprep.subr.bf16.mxu0 0
    %138 = vmatpush1.bf16.msra.mxu0 0
    %139 = vmatprep.subr.bf16.mxu0 0
    %140 = vmatpush1.bf16.msra.mxu0 0
    %141 = vmatprep.subr.bf16.mxu0 0
    %142 = vmatpush1.bf16.msra.mxu0 0
    %143 = vmatprep.subr.bf16.mxu0 0
    %144 = vmatpush1.bf16.msra.mxu0 0
    %145 = vmatprep.mubr.bf16.mxu0 0
    %146 = vmatmul.mubr.bf16.gmra.mrb[0].mxu0 %v111
    %v147 = vpop.f32.mrb[0].mxu0
    %v148 = vadd.f32 %v103, %v147
    %v149 = vpop.f32.mrb[0].mxu0
    %v150 = vpop.f32.mrb[0].mxu0
    %v151 = vadd.f32 %v103, %v150
    %v152 = vpop.f32.mrb[0].mxu0
    %153 = vdwg.mxu0
    %v154 = vmax.f32 %v148, 0.0
    %v155 = vmax.f32 %v151, 0.0
    %v156 = vpack.c.bf16 %v155, %v154
    %v158 = vunpack.c.l.b16 %v156
    %v159 = vunpack.c.h.b16 %v156
    %v160 = vpack.c.b16 %v158, %v158
    %v161 = vpack.c.b16 %v159, %v159
    %164 = vst [vmem:[#allocation2] sm:$0xf] %v160
    %165 = vst [vmem:[#allocation2 + $0x4] sm:$0xf] %v161
    // Predicated region
    $region22: #{tpu_custom_call.1} parent=1 // pred_check
      _
    $region23: #{tpu_custom_call.1} parent=1 // pred_check_branch
      %167 = sbr.rel (0) target = $region25
    $region24: #{tpu_custom_call.1} parent=1 // pred_region
      %s169 = ssub.s32 128, 128
      %170 = vsyncadd [#allocation3], %s169
      %s171 = sshll.u32 [#allocation2], 4
      %s172 = int_to_ptr.vmem [resolvable:$true] %s171
      %177 = dma.vmem_to_hbm [thread:$0]  %s172, 128, %s5, [#allocation3], 64, 64, 4
    $region25: #{tpu_custom_call.1} parent=1 // pred_fallthru
      _
    // Predicated region
    $region26: #{tpu_custom_call.1} parent=1 // pred_check
      _
    $region27: #{tpu_custom_call.1} parent=1 // pred_check_branch
      %179 = sbr.rel (0) target = $region29
    $region28: #{tpu_custom_call.1} parent=1 // pred_region
      %180 = dma.done [#allocation3], 128
    $region29: #{tpu_custom_call.1} parent=1 // pred_fallthru
      _
    %181 = vsyncpa [#allocation3], 1

</llo_original>
